<compile_context>
chip_gen: v7x
topology: tpu7x:2x2x1
jax: 0.10.0
libtpu: 0.0.40
codegen_flags: <defaults>
</compile_context>

<pallas_src>
import functools

import jax
import jax.numpy as jnp
from jax.experimental import pallas as pl
from jax.experimental.pallas import tpu as pltpu

_LANES = 128  # vreg lane width


def _track_layout(seq_len: int, emb_dim: int, track_size: int):
    """Static (col_start, col_end, left_shift) per track, mirroring torch.split."""
    tracks = []
    c, i = 0, 0
    while c < emb_dim:
        c1 = min(c + track_size, emb_dim)
        s = 0 if i == 0 else (2 ** (i - 1)) % seq_len
        tracks.append((c, c1, s))
        c, i = c1, i + 1
    return tracks


def _roll_rows_up(blk, s: int):
    """out[j] = blk[(j + s) % L]  for static 0 < s < L  (== torch.roll(blk, -s, 0))."""
    return jnp.concatenate([blk[s:, :], blk[:s, :]], axis=0)


def _make_rotate_chord_kernel(seq_len: int, emb_dim: int, track_size: int):
    tracks = _track_layout(seq_len, emb_dim, track_size)

    # Static 128-lane column groups; for each group record the (c0, c1, shift)
    # of the overlapping tracks (adjacent tracks with equal effective shift merged).
    groups = []
    g0 = 0
    while g0 < emb_dim:
        g1 = min(g0 + _LANES, emb_dim)
        overl = []
        for (c0, c1, s) in tracks:
            if c0 < g1 and c1 > g0:
                if overl and overl[-1][2] == s and overl[-1][1] == c0:
                    overl[-1] = (overl[-1][0], c1, s)
                else:
                    overl.append((c0, c1, s))
        groups.append((g0, g1, tuple(overl)))
        g0 = g1

    def kernel(x_ref, o_ref):
        # x_ref, o_ref: (L, D) slab in VMEM.
        for (c_lo, c_hi, overl) in groups:              # static unrolled loop
            blk = x_ref[:, c_lo:c_hi]                   # dense 128-lane-aligned load
            out = None
            col = None
            for (c0, c1, s) in overl:                   # static unrolled loop
                rolled = blk if s == 0 else _roll_rows_up(blk, s)
                if out is None:
                    out = rolled                        # first track = default fill
                else:
                    if col is None:
                        col = jax.lax.broadcasted_iota(
                            jnp.int32, (seq_len, c_hi - c_lo), 1) + c_lo
                    out = jnp.where((col >= c0) & (col < c1), rolled, out)
            o_ref[:, c_lo:c_hi] = out                   # ONE dense store per group
    return kernel


@functools.partial(jax.jit, static_argnums=(1,))
def rotate_chord_batched(x, track_size: int):
    """Rotation for a batch of equal-length sequences, x: (B, L, D)."""
    B, L, D = x.shape
    kernel = _make_rotate_chord_kernel(L, D, track_size)
    itemsize = jnp.dtype(x.dtype).itemsize
    block_bytes = L * D * itemsize
    # in + out slabs, double-buffered, plus slack; clamp so it also fits v7x's
    # 64 MiB physical VMEM.
    vmem_limit = int(min(max(4 * block_bytes + (4 << 20), 32 << 20), 64 << 20))
    # TODO(synk): for (L, D) slabs exceeding this VMEM budget (very long L), add a
    # sequence-tiled variant (grid over L chunks + scalar-prefetched shift table
    # with wrap handling); the current kernel keeps a full slab resident per step.
    return pl.pallas_call(
        kernel,
        out_shape=jax.ShapeDtypeStruct((B, L, D), x.dtype),
        grid_spec=pltpu.PrefetchScalarGridSpec(
            num_scalar_prefetch=0,
            grid=(B,),
            in_specs=[pl.BlockSpec((None, L, D), lambda b: (b, 0, 0))],
            out_specs=pl.BlockSpec((None, L, D), lambda b: (b, 0, 0)),
        ),
        compiler_params=pltpu.CompilerParams(
            dimension_semantics=("parallel",),
            vmem_limit_bytes=vmem_limit,
        ),
        cost_estimate=pl.CostEstimate(
            flops=0, transcendentals=0,
            bytes_accessed=2 * B * L * D * itemsize),
    )(x)


def rotate_chord_varlen(x, lengths, track_size: int):
    """Pallas implementation of RotateChordVarLen.forward.

    x: (N, D) packed rows; lengths: host-known ints (the PyTorch reference calls
    lengths.tolist(), so lengths are host data by contract)."""
    lengths = [int(v) for v in lengths]
    N, D = x.shape
    assert sum(lengths) == N, "lengths must sum to x.shape[0]"
    if len(set(lengths)) == 1:
        # Equal-length fast path: zero-copy reshape, single launch, parallel batch.
        B, L = len(lengths), lengths[0]
        return rotate_chord_batched(x.reshape(B, L, D), track_size).reshape(N, D)
    # General variable-length path: one statically specialized launch per sequence.
    outs, off = [], 0
    for L in lengths:
        seg = x[off:off + L]
        outs.append(rotate_chord_batched(seg[None], track_size)[0])
        off += L
    return jnp.concatenate(outs, axis=0)


def rotate_chord_varlen_ref(x, lengths, track_size: int):
    """Pure-JAX reference mirroring the PyTorch forward."""
    D = x.shape[-1]
    outs, off = [], 0
    for L in [int(v) for v in lengths]:
        seg = x[off:off + L]
        parts, t = [], 0
        for c in range(0, D, track_size):
            sub = seg[:, c:min(c + track_size, D)]
            parts.append(sub if t == 0 else jnp.roll(sub, -(2 ** (t - 1)), axis=0))
            t += 1
        outs.append(jnp.concatenate(parts, axis=-1))
        off += L
    return jnp.concatenate(outs, axis=0)


if __name__ == "__main__":
    track_size = 8

    # Test 1: variable-length packed batch (two sequences of length 16 and 24, D=32).
    lengths = [16, 24]
    D = 32
    x = jax.random.normal(jax.random.PRNGKey(0), (sum(lengths), D), dtype=jnp.float32)
    out = jax.block_until_ready(rotate_chord_varlen(x, lengths, track_size))
    ref = rotate_chord_varlen_ref(x, lengths, track_size)
    assert out.shape == ref.shape and out.dtype == ref.dtype
    assert jnp.allclose(out, ref), "varlen path mismatch vs reference"

    # Test 2: equal-length fast path with a ragged last track (D=36 -> tracks 8,8,8,8,4).
    lengths2 = [16, 16]
    D2 = 36
    x2 = jax.random.normal(jax.random.PRNGKey(0), (sum(lengths2), D2), dtype=jnp.float32)
    out2 = jax.block_until_ready(rotate_chord_varlen(x2, lengths2, track_size))
    ref2 = rotate_chord_varlen_ref(x2, lengths2, track_size)
    assert jnp.allclose(out2, ref2), "equal-length path mismatch vs reference"

    print("KERNEL_OK")
</pallas_src>

<mosaic_0001>
module attributes {stable_mosaic.version = 11 : i64} {
  func.func @kernel(%arg0: i32, %arg1: memref<1x16x32xf32, #tpu.memory_space<vmem>>, %arg2: memref<1x16x32xf32, #tpu.memory_space<vmem>>) attributes {dimension_semantics = [#tpu.dimension_semantics<parallel>], iteration_bounds = array<i64: 1>, scalar_prefetch = 0 : i64, scratch_operands = 0 : i64, tpu.core_type = #tpu.core_type<tc>, window_params = [{transform_indices = @transform_0, window_bounds = array<i64: 1, 16, 32>}, {transform_indices = @transform_1, window_bounds = array<i64: 1, 16, 32>}]} {
    %c0 = arith.constant 0 : index
    %c0_0 = arith.constant 0 : index
    %c0_1 = arith.constant 0 : index
    %0 = vector.load %arg1[%c0, %c0_0, %c0_1] : memref<1x16x32xf32, #tpu.memory_space<vmem>>, vector<1x16x32xf32>
    %1 = vector.shape_cast %0 : vector<1x16x32xf32> to vector<16x32xf32>
    %2 = vector.extract_strided_slice %1 {offsets = [1, 0], sizes = [15, 32], strides = [1, 1]} : vector<16x32xf32> to vector<15x32xf32>
    %3 = vector.extract_strided_slice %1 {offsets = [0, 0], sizes = [1, 32], strides = [1, 1]} : vector<16x32xf32> to vector<1x32xf32>
    %4 = tpu.concatenate %2, %3 in 0 : vector<15x32xf32>, vector<1x32xf32> -> vector<16x32xf32>
    %5 = tpu.iota {dimensions = array<i32: 1>} : vector<16x32xi32>
    %c0_i32 = arith.constant 0 : i32
    %6 = vector.broadcast %c0_i32 : i32 to vector<16x32xi32>
    %7 = arith.addi %5, %6 : vector<16x32xi32>
    %c8_i32 = arith.constant 8 : i32
    %8 = vector.broadcast %c8_i32 : i32 to vector<16x32xi32>
    %9 = arith.cmpi sge, %7, %8 : vector<16x32xi32>
    %c16_i32 = arith.constant 16 : i32
    %10 = vector.broadcast %c16_i32 : i32 to vector<16x32xi32>
    %11 = arith.cmpi slt, %7, %10 : vector<16x32xi32>
    %12 = arith.andi %9, %11 : vector<16x32xi1>
    %13 = arith.select %12, %4, %1 : vector<16x32xi1>, vector<16x32xf32>
    %14 = vector.extract_strided_slice %1 {offsets = [2, 0], sizes = [14, 32], strides = [1, 1]} : vector<16x32xf32> to vector<14x32xf32>
    %15 = vector.extract_strided_slice %1 {offsets = [0, 0], sizes = [2, 32], strides = [1, 1]} : vector<16x32xf32> to vector<2x32xf32>
    %16 = tpu.concatenate %14, %15 in 0 : vector<14x32xf32>, vector<2x32xf32> -> vector<16x32xf32>
    %c16_i32_2 = arith.constant 16 : i32
    %17 = vector.broadcast %c16_i32_2 : i32 to vector<16x32xi32>
    %18 = arith.cmpi sge, %7, %17 : vector<16x32xi32>
    %c24_i32 = arith.constant 24 : i32
    %19 = vector.broadcast %c24_i32 : i32 to vector<16x32xi32>
    %20 = arith.cmpi slt, %7, %19 : vector<16x32xi32>
    %21 = arith.andi %18, %20 : vector<16x32xi1>
    %22 = arith.select %21, %16, %13 : vector<16x32xi1>, vector<16x32xf32>
    %23 = vector.extract_strided_slice %1 {offsets = [4, 0], sizes = [12, 32], strides = [1, 1]} : vector<16x32xf32> to vector<12x32xf32>
    %24 = vector.extract_strided_slice %1 {offsets = [0, 0], sizes = [4, 32], strides = [1, 1]} : vector<16x32xf32> to vector<4x32xf32>
    %25 = tpu.concatenate %23, %24 in 0 : vector<12x32xf32>, vector<4x32xf32> -> vector<16x32xf32>
    %c24_i32_3 = arith.constant 24 : i32
    %26 = vector.broadcast %c24_i32_3 : i32 to vector<16x32xi32>
    %27 = arith.cmpi sge, %7, %26 : vector<16x32xi32>
    %c32_i32 = arith.constant 32 : i32
    %28 = vector.broadcast %c32_i32 : i32 to vector<16x32xi32>
    %29 = arith.cmpi slt, %7, %28 : vector<16x32xi32>
    %30 = arith.andi %27, %29 : vector<16x32xi1>
    %31 = arith.select %30, %25, %22 : vector<16x32xi1>, vector<16x32xf32>
    %c0_4 = arith.constant 0 : index
    %c0_5 = arith.constant 0 : index
    %c0_6 = arith.constant 0 : index
    %32 = vector.load %arg2[%c0_4, %c0_5, %c0_6] : memref<1x16x32xf32, #tpu.memory_space<vmem>>, vector<1x16x32xf32>
    %33 = vector.shape_cast %32 : vector<1x16x32xf32> to vector<16x32xf32>
    %34 = vector.shape_cast %31 : vector<16x32xf32> to vector<1x16x32xf32>
    tpu.vector_store %arg2[%c0_4, %c0_5, %c0_6], %34 {strides = array<i32>} : memref<1x16x32xf32, #tpu.memory_space<vmem>>, vector<1x16x32xf32>,
    return
  }
  func.func @transform_0(%arg0: i32) -> (i32, i32, i32) {
    %c0_i32 = arith.constant 0 : i32
    %c0_i32_0 = arith.constant 0 : i32
    %c0_i32_1 = arith.constant 0 : i32
    return %arg0, %c0_i32, %c0_i32_0 : i32, i32, i32
  }
  func.func @transform_1(%arg0: i32) -> (i32, i32, i32) {
    %c0_i32 = arith.constant 0 : i32
    %c0_i32_0 = arith.constant 0 : i32
    %c0_i32_1 = arith.constant 0 : i32
    return %arg0, %c0_i32, %c0_i32_0 : i32, i32, i32
  }
}

</mosaic_0001>

<llo_original>
// kernel: rotate_chord_batched.1
$region0: #{rotate_chord_batched.1}
  #allocation0 [shape = 'u32[]', space=smem, size = 0x4, offset = 0x4, fixed_abs, tag = 'smem constant byte address 0x4 - core index']
  #allocation1 [shape = 'u32[144,128]{1,0:T(1,128)}', space=vmem, size = 0x12000, scoped, tag = 'internal scratch']
  %s0 = inlined_call_operand.hbm [shape: f32[1,16,32], index: 0, kind: input, shape index: {}]
  %s1 = inlined_call_operand.hbm [shape: f32[1,16,32], index: 1, kind: output, shape index: {}]
  %s2 = sld [smem:[#allocation0]]
  $region18: #{rotate_chord_batched.1} parent=0
    _
  %s4 = ssub.s32 1, %s2
  %s5 = scalar_select 0, %s4, %s2
  $region1: #{rotate_chord_batched.1} parent=0
    #allocation2 [shape = 'u8[8192]{0}', space=vmem, size = 0x2000, scoped, tag = 'input window, operand 0, single buffered']
    #allocation3 [shape = 's32[1]{0}', space=sflag, size = 0x4, scoped, tag = 'scoped memory for rotate_chord_batched.1']
    #allocation4 [shape = 's32[1]{0}', space=sflag, size = 0x4, scoped, tag = 'scoped memory for rotate_chord_batched.1']
    #allocation5 [shape = 'u8[8192]{0}', space=vmem, size = 0x2000, scoped, tag = 'output window, operand 0, single buffered']
    %6 = vsyncpa [#allocation3], 0
    %7 = vsyncpa [#allocation4], 0
    // Predicated region
    $region2: #{rotate_chord_batched.1} parent=1 // pred_check
      _
    $region3: #{rotate_chord_batched.1} parent=1 // pred_check_branch
      %9 = sbr.rel (0) target = $region5
    $region4: #{rotate_chord_batched.1} parent=1 // pred_region
      %s11 = ssub.s32 256, 256
      %12 = vsyncadd [#allocation3], %s11
      %s13 = sshll.u32 [#allocation2], 4
      %s14 = int_to_ptr.vmem [resolvable:$true] %s13
      %19 = dma.hbm_to_vmem [thread:$0]  %s0, 256, %s14, [#allocation3], 128, 128, 8
    $region5: #{rotate_chord_batched.1} parent=1 // pred_fallthru
      _
    // Predicated region
    $region6: #{rotate_chord_batched.1} parent=1 // pred_check
      _
    $region7: #{rotate_chord_batched.1} parent=1 // pred_check_branch
      %21 = sbr.rel (0) target = $region9
    $region8: #{rotate_chord_batched.1} parent=1 // pred_region
      %22 = dma.done [#allocation3], 256
    $region9: #{rotate_chord_batched.1} parent=1 // pred_fallthru
      _
    %v23 = vld [vmem:[#allocation2] sm:$0xff]
    %v24 = vld [vmem:[#allocation2 + $0x8] sm:$0xff]
    %vm27 = vcmask 1046528
    %v28 = vrot.slane %v23, 1
    %v29 = vrot.slane %v24, 1
    %v30 = vsel %vm27, %v28, %v29
    %v34 = vsel %vm27, %v29, %v28
    %v35 = vlaneseq
    %v36 = vand.u32 %v35, 127
    %vm37 = vcmp.ge.s32.totalorder %v36, 8
    %vm38 = vcmp.lt.s32.totalorder %v36, 16
    %vm39 = vmand %vm37, %vm38
    %v40 = vsel %vm39, %v30, %v23
    %v41 = vsel %vm39, %v34, %v24
    %vm42 = vcmask 1045504
    %v43 = vrot.slane %v23, 2
    %v44 = vrot.slane %v24, 2
    %v45 = vsel %vm42, %v43, %v44
    %v49 = vsel %vm42, %v44, %v43
    %vm50 = vcmp.ge.s32.totalorder %v36, 16
    %vm51 = vcmp.lt.s32.totalorder %v36, 24
    %vm52 = vmand %vm50, %vm51
    %v53 = vsel %vm52, %v45, %v40
    %v54 = vsel %vm52, %v49, %v41
    %vm55 = vcmask 1043456
    %v56 = vrot.slane %v23, 4
    %v57 = vrot.slane %v24, 4
    %v58 = vsel %vm55, %v56, %v57
    %v62 = vsel %vm55, %v57, %v56
    %vm63 = vcmp.ge.s32.totalorder %v36, 24
    %vm64 = vcmp.lt.s32.totalorder %v36, 32
    %vm65 = vmand %vm63, %vm64
    %v66 = vsel %vm65, %v58, %v53
    %v67 = vsel %vm65, %v62, %v54
    %vm68 = vcmask 261120
    %69 = vst.msk [vmem:[#allocation5] sm:$0xff] %vm68, %v66
    %70 = vst.msk [vmem:[#allocation5 + $0x8] sm:$0xff] %vm68, %v67
    // Predicated region
    $region10: #{rotate_chord_batched.1} parent=1 // pred_check
      _
    $region11: #{rotate_chord_batched.1} parent=1 // pred_check_branch
      %72 = sbr.rel (0) target = $region13
    $region12: #{rotate_chord_batched.1} parent=1 // pred_region
      %s74 = ssub.s32 256, 256
      %75 = vsyncadd [#allocation4], %s74
      %s76 = sshll.u32 [#allocation5], 4
      %s77 = int_to_ptr.vmem [resolvable:$true] %s76
      %82 = dma.vmem_to_hbm [thread:$0]  %s77, 256, %s1, [#allocation4], 128, 128, 8
    $region13: #{rotate_chord_batched.1} parent=1 // pred_fallthru
      _
    // Predicated region
    $region14: #{rotate_chord_batched.1} parent=1 // pred_check
      _
    $region15: #{rotate_chord_batched.1} parent=1 // pred_check_branch
      %84 = sbr.rel (0) target = $region17
    $region16: #{rotate_chord_batched.1} parent=1 // pred_region
      %85 = dma.done [#allocation4], 256
    $region17: #{rotate_chord_batched.1} parent=1 // pred_fallthru
      _
    %86 = vsyncpa [#allocation3], 1
    %87 = vsyncpa [#allocation4], 1

</llo_original>
